<compile_context>
chip_gen: v5e
topology: v5e:2x2
jax: 0.10.0
libtpu: 0.0.40
codegen_flags: <defaults>
</compile_context>

<pallas_src>
import jax
import jax.numpy as jnp
from jax.experimental import pallas as pl
from jax.experimental.pallas import tpu as pltpu

OUT_NODES = 7
D_IN = 320
D_H1 = 256
D_H2 = 64
D_H2_PAD = 128     # pad 64 -> 128 lanes
D_OUT_PAD = 128    # pad 7  -> 128 lanes
NEG_BIG = -1e30    # finite "minus infinity" for padded output bias


def _mlp_kernel(s_ref, k_ref, w1s_ref, w1k_ref, b1_ref,
                w2_ref, b2_ref, w3_ref, b3_ref, o_ref):
    # Layer 1: split matmul replaces the wrapper-side concat.
    h1 = jnp.dot(s_ref[...], w1s_ref[...], preferred_element_type=jnp.float32)
    h1 = h1 + jnp.dot(k_ref[...], w1k_ref[...], preferred_element_type=jnp.float32)
    h1 = jnp.maximum(h1 + b1_ref[...], 0.0)

    # Layer 2 (dropout is identity in eval mode); padded hidden cols stay exactly 0.
    h2 = jnp.dot(h1.astype(jnp.bfloat16), w2_ref[...],
                 preferred_element_type=jnp.float32)
    h2 = jnp.maximum(h2 + b2_ref[...], 0.0)

    # Layer 3; padded output columns get bias -1e30 -> exp() == 0.
    logits = jnp.dot(h2.astype(jnp.bfloat16), w3_ref[...],
                     preferred_element_type=jnp.float32)
    logits = logits + b3_ref[...]

    # Numerically stable softmax over the 128-wide (padded) lane dim.
    m = jnp.max(logits, axis=1, keepdims=True)
    e = jnp.exp(logits - m)
    denom = jnp.sum(e, axis=1, keepdims=True)
    o_ref[...] = e * pl.reciprocal(denom, approx=True)


def _round_up(x, m):
    return (x + m - 1) // m * m


def ensemble_forward(s_input, k_input, params, *, tile_b=1024):
    """s_input: [B, Ds], k_input: [B, Dk] with Ds + Dk == 320. Returns [B, 7]."""
    w1, b1, w2, b2, w3, b3 = params
    B, Ds = s_input.shape
    Dk = k_input.shape[1]
    assert Ds + Dk == D_IN

    # ---- weight prep (tiny; callers can hoist/cache this) ----
    w1s = w1[:Ds].astype(jnp.bfloat16)                      # [Ds, 256]
    w1k = w1[Ds:].astype(jnp.bfloat16)                      # [Dk, 256]
    b1r = b1.reshape(1, D_H1).astype(jnp.float32)

    w2p = jnp.zeros((D_H1, D_H2_PAD), jnp.bfloat16).at[:, :D_H2].set(
        w2.astype(jnp.bfloat16))
    b2p = jnp.zeros((1, D_H2_PAD), jnp.float32).at[0, :D_H2].set(
        b2.astype(jnp.float32))
    w3p = jnp.zeros((D_H2_PAD, D_OUT_PAD), jnp.bfloat16).at[:D_H2, :OUT_NODES].set(
        w3.astype(jnp.bfloat16))
    b3p = jnp.full((1, D_OUT_PAD), NEG_BIG, jnp.float32).at[0, :OUT_NODES].set(
        b3.astype(jnp.float32))

    # ---- batch tiling ----
    tile_b = min(tile_b, _round_up(B, 16))      # bf16 sublane alignment
    Bp = _round_up(B, tile_b)
    s = s_input.astype(jnp.bfloat16)
    k = k_input.astype(jnp.bfloat16)
    if Bp != B:
        s = jnp.pad(s, ((0, Bp - B), (0, 0)))
        k = jnp.pad(k, ((0, Bp - B), (0, 0)))

    grid = (Bp // tile_b,)
    streamed = lambda shape: pl.BlockSpec(shape, lambda i: (i, 0))   # over batch
    resident = lambda shape: pl.BlockSpec(shape, lambda i: (0, 0))   # stays in VMEM

    out = pl.pallas_call(
        _mlp_kernel,
        out_shape=jax.ShapeDtypeStruct((Bp, D_OUT_PAD), jnp.float32),
        grid_spec=pltpu.PrefetchScalarGridSpec(
            num_scalar_prefetch=0,
            grid=grid,
            in_specs=[
                streamed((tile_b, Ds)),
                streamed((tile_b, Dk)),
                resident((Ds, D_H1)),
                resident((Dk, D_H1)),
                resident((1, D_H1)),
                resident((D_H1, D_H2_PAD)),
                resident((1, D_H2_PAD)),
                resident((D_H2_PAD, D_OUT_PAD)),
                resident((1, D_OUT_PAD)),
            ],
            out_specs=streamed((tile_b, D_OUT_PAD)),
        ),
        compiler_params=pltpu.CompilerParams(
            dimension_semantics=("parallel",)),
    )(s, k, w1s, w1k, b1r, w2p, b2p, w3p, b3p)

    return out[:B, :OUT_NODES]


def init_params(key):
    """Deterministic init mimicking nn.Linear's U(-1/sqrt(fan_in), 1/sqrt(fan_in)).
    Weights are stored as [in_features, out_features]."""
    ks = jax.random.split(key, 6)

    def linear(kw, kb, fan_in, fan_out):
        bound = 1.0 / jnp.sqrt(jnp.float32(fan_in))
        w = jax.random.uniform(kw, (fan_in, fan_out), jnp.float32, -bound, bound)
        b = jax.random.uniform(kb, (fan_out,), jnp.float32, -bound, bound)
        return w, b

    w1, b1 = linear(ks[0], ks[1], D_IN, D_H1)
    w2, b2 = linear(ks[2], ks[3], D_H1, D_H2)
    w3, b3 = linear(ks[4], ks[5], D_H2, OUT_NODES)
    return (w1, b1, w2, b2, w3, b3)


def reference_forward(s_input, k_input, params):
    w1, b1, w2, b2, w3, b3 = params
    x = jnp.concatenate([s_input, k_input], axis=1).astype(jnp.float32)
    h1 = jnp.maximum(x @ w1 + b1, 0.0)
    h2 = jnp.maximum(h1 @ w2 + b2, 0.0)
    return jax.nn.softmax(h2 @ w3 + b3, axis=1)


if __name__ == "__main__":
    key = jax.random.PRNGKey(0)
    kp, ks_, kk_ = jax.random.split(key, 3)

    B = 8
    DS, DK = 256, 64  # concatenated -> 320 features (matches input_layer)
    s_input = jax.random.normal(ks_, (B, DS), jnp.float32)
    k_input = jax.random.normal(kk_, (B, DK), jnp.float32)

    params = init_params(kp)

    out = ensemble_forward(s_input, k_input, params)
    out = jax.block_until_ready(out)

    assert out.shape == (B, OUT_NODES)
    # softmax rows should sum to ~1 (approx reciprocal -> loose tolerance)
    assert jnp.allclose(jnp.sum(out, axis=1), 1.0, atol=1e-2)
    # match the pure-JAX f32 reference within bf16 streaming tolerance
    ref = reference_forward(s_input, k_input, params)
    assert float(jnp.max(jnp.abs(out - ref))) < 5e-2

    print("KERNEL_OK")
</pallas_src>

<mosaic_0001>
module attributes {stable_mosaic.version = 11 : i64} {
  func.func @_mlp_kernel(%arg0: i32, %arg1: memref<16x256xbf16, #tpu.memory_space<vmem>>, %arg2: memref<16x64xbf16, #tpu.memory_space<vmem>>, %arg3: memref<256x256xbf16, #tpu.memory_space<vmem>>, %arg4: memref<64x256xbf16, #tpu.memory_space<vmem>>, %arg5: memref<1x256xf32, #tpu.memory_space<vmem>>, %arg6: memref<256x128xbf16, #tpu.memory_space<vmem>>, %arg7: memref<1x128xf32, #tpu.memory_space<vmem>>, %arg8: memref<128x128xbf16, #tpu.memory_space<vmem>>, %arg9: memref<1x128xf32, #tpu.memory_space<vmem>>, %arg10: memref<16x128xf32, #tpu.memory_space<vmem>>) attributes {dimension_semantics = [#tpu.dimension_semantics<parallel>], iteration_bounds = array<i64: 1>, scalar_prefetch = 0 : i64, scratch_operands = 0 : i64, tpu.core_type = #tpu.core_type<tc>, window_params = [{transform_indices = @transform_0, window_bounds = array<i64: 16, 256>}, {transform_indices = @transform_1, window_bounds = array<i64: 16, 64>}, {pipeline_mode = #tpu.pipeline_mode<synchronous>, transform_indices = @transform_2, window_bounds = array<i64: 256, 256>}, {pipeline_mode = #tpu.pipeline_mode<synchronous>, transform_indices = @transform_3, window_bounds = array<i64: 64, 256>}, {pipeline_mode = #tpu.pipeline_mode<synchronous>, transform_indices = @transform_4, window_bounds = array<i64: 1, 256>}, {pipeline_mode = #tpu.pipeline_mode<synchronous>, transform_indices = @transform_5, window_bounds = array<i64: 256, 128>}, {pipeline_mode = #tpu.pipeline_mode<synchronous>, transform_indices = @transform_6, window_bounds = array<i64: 1, 128>}, {pipeline_mode = #tpu.pipeline_mode<synchronous>, transform_indices = @transform_7, window_bounds = array<i64: 128, 128>}, {pipeline_mode = #tpu.pipeline_mode<synchronous>, transform_indices = @transform_8, window_bounds = array<i64: 1, 128>}, {transform_indices = @transform_9, window_bounds = array<i64: 16, 128>}]} {
    %c0 = arith.constant 0 : index
    %c0_0 = arith.constant 0 : index
    %0 = vector.load %arg1[%c0, %c0_0] : memref<16x256xbf16, #tpu.memory_space<vmem>>, vector<16x256xbf16>
    %c0_1 = arith.constant 0 : index
    %c0_2 = arith.constant 0 : index
    %1 = vector.load %arg3[%c0_1, %c0_2] : memref<256x256xbf16, #tpu.memory_space<vmem>>, vector<256x256xbf16>
    %cst = arith.constant dense<0.000000e+00> : vector<16x256xf32>
    %2 = tpu.matmul %0, %1, %cst {dimension_numbers = #tpu.dot_dimension_numbers<[1], [0], [0], [1], [0, 0, 1, 1], [], []>} : vector<16x256xbf16>, vector<256x256xbf16>, vector<16x256xf32> -> vector<16x256xf32>
    %c0_3 = arith.constant 0 : index
    %c0_4 = arith.constant 0 : index
    %3 = vector.load %arg2[%c0_3, %c0_4] : memref<16x64xbf16, #tpu.memory_space<vmem>>, vector<16x64xbf16>
    %c0_5 = arith.constant 0 : index
    %c0_6 = arith.constant 0 : index
    %4 = vector.load %arg4[%c0_5, %c0_6] : memref<64x256xbf16, #tpu.memory_space<vmem>>, vector<64x256xbf16>
    %cst_7 = arith.constant dense<0.000000e+00> : vector<16x256xf32>
    %5 = tpu.matmul %3, %4, %cst_7 {dimension_numbers = #tpu.dot_dimension_numbers<[1], [0], [0], [1], [0, 0, 1, 1], [], []>} : vector<16x64xbf16>, vector<64x256xbf16>, vector<16x256xf32> -> vector<16x256xf32>
    %6 = arith.addf %2, %5 : vector<16x256xf32>
    %c0_8 = arith.constant 0 : index
    %c0_9 = arith.constant 0 : index
    %7 = vector.load %arg5[%c0_8, %c0_9] : memref<1x256xf32, #tpu.memory_space<vmem>>, vector<1x256xf32>
    %8 = vector.broadcast %7 : vector<1x256xf32> to vector<16x256xf32>
    %9 = arith.addf %6, %8 : vector<16x256xf32>
    %cst_10 = arith.constant 0.000000e+00 : f32
    %10 = vector.broadcast %cst_10 : f32 to vector<16x256xf32>
    %11 = arith.maximumf %9, %10 : vector<16x256xf32>
    %12 = arith.truncf %11 : vector<16x256xf32> to vector<16x256xbf16>
    %c0_11 = arith.constant 0 : index
    %c0_12 = arith.constant 0 : index
    %13 = vector.load %arg6[%c0_11, %c0_12] : memref<256x128xbf16, #tpu.memory_space<vmem>>, vector<256x128xbf16>
    %cst_13 = arith.constant dense<0.000000e+00> : vector<16x128xf32>
    %14 = tpu.matmul %12, %13, %cst_13 {dimension_numbers = #tpu.dot_dimension_numbers<[1], [0], [0], [1], [0, 0, 1, 1], [], []>} : vector<16x256xbf16>, vector<256x128xbf16>, vector<16x128xf32> -> vector<16x128xf32>
    %c0_14 = arith.constant 0 : index
    %c0_15 = arith.constant 0 : index
    %15 = vector.load %arg7[%c0_14, %c0_15] : memref<1x128xf32, #tpu.memory_space<vmem>>, vector<1x128xf32>
    %16 = vector.broadcast %15 : vector<1x128xf32> to vector<16x128xf32>
    %17 = arith.addf %14, %16 : vector<16x128xf32>
    %cst_16 = arith.constant 0.000000e+00 : f32
    %18 = vector.broadcast %cst_16 : f32 to vector<16x128xf32>
    %19 = arith.maximumf %17, %18 : vector<16x128xf32>
    %20 = arith.truncf %19 : vector<16x128xf32> to vector<16x128xbf16>
    %c0_17 = arith.constant 0 : index
    %c0_18 = arith.constant 0 : index
    %21 = vector.load %arg8[%c0_17, %c0_18] : memref<128x128xbf16, #tpu.memory_space<vmem>>, vector<128x128xbf16>
    %cst_19 = arith.constant dense<0.000000e+00> : vector<16x128xf32>
    %22 = tpu.matmul %20, %21, %cst_19 {dimension_numbers = #tpu.dot_dimension_numbers<[1], [0], [0], [1], [0, 0, 1, 1], [], []>} : vector<16x128xbf16>, vector<128x128xbf16>, vector<16x128xf32> -> vector<16x128xf32>
    %c0_20 = arith.constant 0 : index
    %c0_21 = arith.constant 0 : index
    %23 = vector.load %arg9[%c0_20, %c0_21] : memref<1x128xf32, #tpu.memory_space<vmem>>, vector<1x128xf32>
    %24 = vector.broadcast %23 : vector<1x128xf32> to vector<16x128xf32>
    %25 = arith.addf %22, %24 : vector<16x128xf32>
    %cst_22 = arith.constant dense<0xFF800000> : vector<16xf32>
    %26 = vector.multi_reduction <maximumf>, %25, %cst_22 [1] : vector<16x128xf32> to vector<16xf32>
    %27 = vector.shape_cast %26 : vector<16xf32> to vector<16x1xf32>
    %28 = vector.broadcast %27 : vector<16x1xf32> to vector<16x128xf32>
    %29 = arith.subf %25, %28 : vector<16x128xf32>
    %30 = math.exp %29 : vector<16x128xf32>
    %cst_23 = arith.constant dense<0.000000e+00> : vector<16xf32>
    %31 = vector.multi_reduction <add>, %30, %cst_23 [1] : vector<16x128xf32> to vector<16xf32>
    %32 = vector.shape_cast %31 : vector<16xf32> to vector<16x1xf32>
    %33 = tpu.reciprocal %32 {approx = true} : vector<16x1xf32> -> vector<16x1xf32>
    %34 = vector.broadcast %33 : vector<16x1xf32> to vector<16x128xf32>
    %35 = arith.mulf %30, %34 : vector<16x128xf32>
    %c0_24 = arith.constant 0 : index
    %c0_25 = arith.constant 0 : index
    %36 = vector.load %arg10[%c0_24, %c0_25] : memref<16x128xf32, #tpu.memory_space<vmem>>, vector<16x128xf32>
    tpu.vector_store %arg10[%c0_24, %c0_25], %35 {strides = array<i32>} : memref<16x128xf32, #tpu.memory_space<vmem>>, vector<16x128xf32>,
    return
  }
  func.func @transform_0(%arg0: i32) -> (i32, i32) {
    %c0_i32 = arith.constant 0 : i32
    %c0_i32_0 = arith.constant 0 : i32
    return %arg0, %c0_i32 : i32, i32
  }
  func.func @transform_1(%arg0: i32) -> (i32, i32) {
    %c0_i32 = arith.constant 0 : i32
    %c0_i32_0 = arith.constant 0 : i32
    return %arg0, %c0_i32 : i32, i32
  }
  func.func @transform_2(%arg0: i32) -> (i32, i32) {
    %c0_i32 = arith.constant 0 : i32
    %c0_i32_0 = arith.constant 0 : i32
    %c0_i32_1 = arith.constant 0 : i32
    return %c0_i32, %c0_i32_0 : i32, i32
  }
  func.func @transform_3(%arg0: i32) -> (i32, i32) {
    %c0_i32 = arith.constant 0 : i32
    %c0_i32_0 = arith.constant 0 : i32
    %c0_i32_1 = arith.constant 0 : i32
    return %c0_i32, %c0_i32_0 : i32, i32
  }
  func.func @transform_4(%arg0: i32) -> (i32, i32) {
    %c0_i32 = arith.constant 0 : i32
    %c0_i32_0 = arith.constant 0 : i32
    %c0_i32_1 = arith.constant 0 : i32
    return %c0_i32, %c0_i32_0 : i32, i32
  }
  func.func @transform_5(%arg0: i32) -> (i32, i32) {
    %c0_i32 = arith.constant 0 : i32
    %c0_i32_0 = arith.constant 0 : i32
    %c0_i32_1 = arith.constant 0 : i32
    return %c0_i32, %c0_i32_0 : i32, i32
  }
  func.func @transform_6(%arg0: i32) -> (i32, i32) {
    %c0_i32 = arith.constant 0 : i32
    %c0_i32_0 = arith.constant 0 : i32
    %c0_i32_1 = arith.constant 0 : i32
    return %c0_i32, %c0_i32_0 : i32, i32
  }
  func.func @transform_7(%arg0: i32) -> (i32, i32) {
    %c0_i32 = arith.constant 0 : i32
    %c0_i32_0 = arith.constant 0 : i32
    %c0_i32_1 = arith.constant 0 : i32
    return %c0_i32, %c0_i32_0 : i32, i32
  }
  func.func @transform_8(%arg0: i32) -> (i32, i32) {
    %c0_i32 = arith.constant 0 : i32
    %c0_i32_0 = arith.constant 0 : i32
    %c0_i32_1 = arith.constant 0 : i32
    return %c0_i32, %c0_i32_0 : i32, i32
  }
  func.func @transform_9(%arg0: i32) -> (i32, i32) {
    %c0_i32 = arith.constant 0 : i32
    %c0_i32_0 = arith.constant 0 : i32
    return %arg0, %c0_i32 : i32, i32
  }
}

</mosaic_0001>

<llo_original>
// kernel: tpu_custom_call.1
$region0: #{tpu_custom_call.1}
  #allocation0 [shape = 'u32[]', space=smem, size = 0x4, offset = 0x4, fixed_abs, tag = 'smem constant byte address 0x4 - core index']
  #allocation1 [shape = 'u32[72,128]{1,0:T(1,128)}', space=vmem, size = 0x9000, scoped, tag = 'internal scratch']
  %s0 = inlined_call_operand.hbm [shape: bf16[16,256], index: 0, kind: input, shape index: {}]
  %s1 = inlined_call_operand.hbm [shape: bf16[16,64], index: 1, kind: input, shape index: {}]
  %s2 = inlined_call_operand.hbm [shape: bf16[256,256], index: 2, kind: input, shape index: {}]
  %s3 = inlined_call_operand.hbm [shape: bf16[64,256], index: 3, kind: input, shape index: {}]
  %s4 = inlined_call_operand.vmem [shape: f32[1,256], index: 4, kind: input, shape index: {}]
  %s5 = inlined_call_operand.hbm [shape: bf16[256,128], index: 5, kind: input, shape index: {}]
  %s6 = inlined_call_operand.vmem [shape: f32[1,128], index: 6, kind: input, shape index: {}]
  %s7 = inlined_call_operand.hbm [shape: bf16[128,128], index: 7, kind: input, shape index: {}]
  %s8 = inlined_call_operand.vmem [shape: f32[1,128], index: 8, kind: input, shape index: {}]
  %s9 = inlined_call_operand.hbm [shape: f32[16,128], index: 9, kind: output, shape index: {}]
  %s10 = sld [smem:[#allocation0]]
  $region70: #{tpu_custom_call.1} parent=0
    _
  %s12 = ssub.s32 1, %s10
  %s13 = scalar_select 0, %s12, %s10
  $region1: #{tpu_custom_call.1} parent=0
    #allocation2 [shape = 'u8[8192]{0}', space=vmem, size = 0x2000, scoped, tag = 'input window, operand 0, single buffered']
    #allocation3 [shape = 's32[1]{0}', space=sflag, size = 0x4, scoped, tag = 'scoped memory for tpu_custom_call.1']
    #allocation4 [shape = 's32[1]{0}', space=sflag, size = 0x4, scoped, tag = 'scoped memory for tpu_custom_call.1']
    #allocation5 [shape = 'u8[4096]{0}', space=vmem, size = 0x1000, scoped, tag = 'input window, operand 1, single buffered']
    #allocation6 [shape = 's32[1]{0}', space=sflag, size = 0x4, scoped, tag = 'scoped memory for tpu_custom_call.1']
    #allocation7 [shape = 'u8[131072]{0}', space=vmem, size = 0x20000, scoped, tag = 'input window, operand 2, single buffered']
    #allocation8 [shape = 'u8[32768]{0}', space=vmem, size = 0x8000, scoped, tag = 'input window, operand 3, single buffered']
    #allocation9 [shape = 's32[1]{0}', space=sflag, size = 0x4, scoped, tag = 'scoped memory for tpu_custom_call.1']
    #allocation10 [shape = 'u8[65536]{0}', space=vmem, size = 0x10000, scoped, tag = 'input window, operand 5, single buffered']
    #allocation11 [shape = 'u8[32768]{0}', space=vmem, size = 0x8000, scoped, tag = 'input window, operand 7, single buffered']
    #allocation12 [shape = 's32[1]{0}', space=sflag, size = 0x4, scoped, tag = 'scoped memory for tpu_custom_call.1']
    #allocation13 [shape = 'u8[8192]{0}', space=vmem, size = 0x2000, scoped, tag = 'output window, operand 0, single buffered']
    %14 = vsyncpa [#allocation3], 0
    %15 = vsyncpa [#allocation6], 0
    %16 = vsyncpa [#allocation9], 0
    %17 = vsyncpa [#allocation12], 0
    %18 = vsyncpa [#allocation4], 0
    // Predicated region
    $region2: #{tpu_custom_call.1} parent=1 // pred_check
      _
    $region3: #{tpu_custom_call.1} parent=1 // pred_check_branch
      %20 = sbr.rel (0) target = $region5
    $region4: #{tpu_custom_call.1} parent=1 // pred_region
      %22 = vsyncadd [#allocation3], 0
      %s23 = sshll.u32 %s0, 4
      %s24 = int_to_ptr.hbm [resolvable:$true] %s23
      %s25 = sshll.u32 [#allocation2], 4
      %s26 = int_to_ptr.vmem [resolvable:$true] %s25
      %31 = dma.hbm_to_vmem [thread:$0]  %s24, 256, %s26, [#allocation3], 128, 128, 8
    $region5: #{tpu_custom_call.1} parent=1 // pred_fallthru
      _
    // Predicated region
    $region6: #{tpu_custom_call.1} parent=1 // pred_check
      _
    $region7: #{tpu_custom_call.1} parent=1 // pred_check_branch
      %33 = sbr.rel (0) target = $region9
    $region8: #{tpu_custom_call.1} parent=1 // pred_region
      %35 = vsyncadd [#allocation6], 0
      %s36 = sshll.u32 %s1, 4
      %s37 = int_to_ptr.hbm [resolvable:$true] %s36
      %s38 = sshll.u32 [#allocation5], 4
      %s39 = int_to_ptr.vmem [resolvable:$true] %s38
      %44 = dma.hbm_to_vmem [thread:$0]  %s37, 128, %s39, [#allocation6], 64, 64, 4
    $region9: #{tpu_custom_call.1} parent=1 // pred_fallthru
      _
    // Predicated region
    $region10: #{tpu_custom_call.1} parent=1 // pred_check
      _
    $region11: #{tpu_custom_call.1} parent=1 // pred_check_branch
      %46 = sbr.rel (0) target = $region13
    $region12: #{tpu_custom_call.1} parent=1 // pred_region
      %48 = vsyncadd [#allocation6], 0
      %s49 = sshll.u32 %s2, 4
      %s50 = int_to_ptr.hbm [resolvable:$true] %s49
      %s51 = sshll.u32 [#allocation7], 4
      %s52 = int_to_ptr.vmem [resolvable:$true] %s51
      %57 = dma.hbm_to_vmem [thread:$0]  %s50, 4096, %s52, [#allocation6], 128, 128, 8
    $region13: #{tpu_custom_call.1} parent=1 // pred_fallthru
      _
    // Predicated region
    $region14: #{tpu_custom_call.1} parent=1 // pred_check
      _
    $region15: #{tpu_custom_call.1} parent=1 // pred_check_branch
      %59 = sbr.rel (0) target = $region17
    $region16: #{tpu_custom_call.1} parent=1 // pred_region
      %61 = vsyncadd [#allocation9], 0
      %s62 = sshll.u32 %s3, 4
      %s63 = int_to_ptr.hbm [resolvable:$true] %s62
      %s64 = sshll.u32 [#allocation8], 4
      %s65 = int_to_ptr.vmem [resolvable:$true] %s64
      %70 = dma.hbm_to_vmem [thread:$0]  %s63, 1024, %s65, [#allocation9], 128, 128, 8
    $region17: #{tpu_custom_call.1} parent=1 // pred_fallthru
      _
    // Predicated region
    $region18: #{tpu_custom_call.1} parent=1 // pred_check
      _
    $region19: #{tpu_custom_call.1} parent=1 // pred_check_branch
      %72 = sbr.rel (0) target = $region21
    $region20: #{tpu_custom_call.1} parent=1 // pred_region
      _
    $region21: #{tpu_custom_call.1} parent=1 // pred_fallthru
      _
    // Predicated region
    $region22: #{tpu_custom_call.1} parent=1 // pred_check
      _
    $region23: #{tpu_custom_call.1} parent=1 // pred_check_branch
      %74 = sbr.rel (0) target = $region25
    $region24: #{tpu_custom_call.1} parent=1 // pred_region
      %76 = vsyncadd [#allocation9], 0
      %s77 = sshll.u32 %s5, 4
      %s78 = int_to_ptr.hbm [resolvable:$true] %s77
      %s79 = sshll.u32 [#allocation10], 4
      %s80 = int_to_ptr.vmem [resolvable:$true] %s79
      %85 = dma.hbm_to_vmem [thread:$0]  %s78, 2048, %s80, [#allocation9], 64, 64, 4
    $region25: #{tpu_custom_call.1} parent=1 // pred_fallthru
      _
    // Predicated region
    $region26: #{tpu_custom_call.1} parent=1 // pred_check
      _
    $region27: #{tpu_custom_call.1} parent=1 // pred_check_branch
      %87 = sbr.rel (0) target = $region29
    $region28: #{tpu_custom_call.1} parent=1 // pred_region
      _
    $region29: #{tpu_custom_call.1} parent=1 // pred_fallthru
      _
    // Predicated region
    $region30: #{tpu_custom_call.1} parent=1 // pred_check
      _
    $region31: #{tpu_custom_call.1} parent=1 // pred_check_branch
      %89 = sbr.rel (0) target = $region33
    $region32: #{tpu_custom_call.1} parent=1 // pred_region
      %91 = vsyncadd [#allocation12], 0
      %s92 = sshll.u32 %s7, 4
      %s93 = int_to_ptr.hbm [resolvable:$true] %s92
      %s94 = sshll.u32 [#allocation11], 4
      %s95 = int_to_ptr.vmem [resolvable:$true] %s94
      %100 = dma.hbm_to_vmem [thread:$0]  %s93, 1024, %s95, [#allocation12], 64, 64, 4
    $region33: #{tpu_custom_call.1} parent=1 // pred_fallthru
      _
    // Predicated region
    $region34: #{tpu_custom_call.1} parent=1 // pred_check
      _
    $region35: #{tpu_custom_call.1} parent=1 // pred_check_branch
      %102 = sbr.rel (0) target = $region37
    $region36: #{tpu_custom_call.1} parent=1 // pred_region
      _
    $region37: #{tpu_custom_call.1} parent=1 // pred_fallthru
      _
    // Predicated region
    $region38: #{tpu_custom_call.1} parent=1 // pred_check
      _
    $region39: #{tpu_custom_call.1} parent=1 // pred_check_branch
      %104 = sbr.rel (0) target = $region41
    $region40: #{tpu_custom_call.1} parent=1 // pred_region
      %106 = dma.done [#allocation3], 256
    $region41: #{tpu_custom_call.1} parent=1 // pred_fallthru
      _
    // Predicated region
    $region42: #{tpu_custom_call.1} parent=1 // pred_check
      _
    $region43: #{tpu_custom_call.1} parent=1 // pred_check_branch
      %108 = sbr.rel (0) target = $region45
    $region44: #{tpu_custom_call.1} parent=1 // pred_region
      %110 = dma.done [#allocation6], 128
    $region45: #{tpu_custom_call.1} parent=1 // pred_fallthru
      _
    // Predicated region
    $region46: #{tpu_custom_call.1} parent=1 // pred_check
      _
    $region47: #{tpu_custom_call.1} parent=1 // pred_check_branch
      %112 = sbr.rel (0) target = $region49
    $region48: #{tpu_custom_call.1} parent=1 // pred_region
      %114 = dma.done [#allocation6], 4096
    $region49: #{tpu_custom_call.1} parent=1 // pred_fallthru
      _
    // Predicated region
    $region50: #{tpu_custom_call.1} parent=1 // pred_check
      _
    $region51: #{tpu_custom_call.1} parent=1 // pred_check_branch
      %116 = sbr.rel (0) target = $region53
    $region52: #{tpu_custom_call.1} parent=1 // pred_region
      %118 = dma.done [#allocation9], 1024
    $region53: #{tpu_custom_call.1} parent=1 // pred_fallthru
      _
    // Predicated region
    $region54: #{tpu_custom_call.1} parent=1 // pred_check
      _
    $region55: #{tpu_custom_call.1} parent=1 // pred_check_branch
      %120 = sbr.rel (0) target = $region57
    $region56: #{tpu_custom_call.1} parent=1 // pred_region
      %122 = dma.done [#allocation9], 2048
    $region57: #{tpu_custom_call.1} parent=1 // pred_fallthru
      _
    // Predicated region
    $region58: #{tpu_custom_call.1} parent=1 // pred_check
      _
    $region59: #{tpu_custom_call.1} parent=1 // pred_check_branch
      %124 = sbr.rel (0) target = $region61
    $region60: #{tpu_custom_call.1} parent=1 // pred_region
      %126 = dma.done [#allocation12], 1024
    $region61: #{tpu_custom_call.1} parent=1 // pred_fallthru
      _
    %v128 = vld [vmem:[#allocation2] sm:$0xff]
    %v129 = vld [vmem:[#allocation2 + $0x8] sm:$0xff]
    %v130 = vld [vmem:[#allocation7] sm:$0xff]
    %v131 = vld [vmem:[#allocation7 + $0x8] sm:$0xff]
    %v132 = vld [vmem:[#allocation7 + $0x10] sm:$0xff]
    %v133 = vld [vmem:[#allocation7 + $0x18] sm:$0xff]
    %v134 = vld [vmem:[#allocation7 + $0x20] sm:$0xff]
    %v135 = vld [vmem:[#allocation7 + $0x28] sm:$0xff]
    %v136 = vld [vmem:[#allocation7 + $0x30] sm:$0xff]
    %v137 = vld [vmem:[#allocation7 + $0x38] sm:$0xff]
    %v138 = vld [vmem:[#allocation7 + $0x40] sm:$0xff]
    %v139 = vld [vmem:[#allocation7 + $0x48] sm:$0xff]
    %v140 = vld [vmem:[#allocation7 + $0x50] sm:$0xff]
    %v141 = vld [vmem:[#allocation7 + $0x58] sm:$0xff]
    %v142 = vld [vmem:[#allocation7 + $0x60] sm:$0xff]
    %v143 = vld [vmem:[#allocation7 + $0x68] sm:$0xff]
    %v144 = vld [vmem:[#allocation7 + $0x70] sm:$0xff]
    %v145 = vld [vmem:[#allocation7 + $0x78] sm:$0xff]
    %v146 = vld [vmem:[#allocation7 + $0x80] sm:$0xff]
    %v147 = vld [vmem:[#allocation7 + $0x88] sm:$0xff]
    %v148 = vld [vmem:[#allocation7 + $0x90] sm:$0xff]
    %v149 = vld [vmem:[#allocation7 + $0x98] sm:$0xff]
    %v150 = vld [vmem:[#allocation7 + $0xa0] sm:$0xff]
    %v151 = vld [vmem:[#allocation7 + $0xa8] sm:$0xff]
    %v152 = vld [vmem:[#allocation7 + $0xb0] sm:$0xff]
    %v153 = vld [vmem:[#allocation7 + $0xb8] sm:$0xff]
    %v154 = vld [vmem:[#allocation7 + $0xc0] sm:$0xff]
    %v155 = vld [vmem:[#allocation7 + $0xc8] sm:$0xff]
    %v156 = vld [vmem:[#allocation7 + $0xd0] sm:$0xff]
    %v157 = vld [vmem:[#allocation7 + $0xd8] sm:$0xff]
    %v158 = vld [vmem:[#allocation7 + $0xe0] sm:$0xff]
    %v159 = vld [vmem:[#allocation7 + $0xe8] sm:$0xff]
    %v160 = vld [vmem:[#allocation7 + $0xf0] sm:$0xff]
    %v161 = vld [vmem:[#allocation7 + $0xf8] sm:$0xff]
    %v162 = vld [vmem:[#allocation5] sm:$0xf]
    %v163 = vld [vmem:[#allocation5 + $0x4] sm:$0xf]
    %v164 = vld [vmem:[#allocation8] sm:$0xff]
    %v165 = vld [vmem:[#allocation8 + $0x8] sm:$0xff]
    %v166 = vld [vmem:[#allocation8 + $0x10] sm:$0xff]
    %v167 = vld [vmem:[#allocation8 + $0x18] sm:$0xff]
    %v168 = vld [vmem:[#allocation8 + $0x20] sm:$0xff]
    %v169 = vld [vmem:[#allocation8 + $0x28] sm:$0xff]
    %v170 = vld [vmem:[#allocation8 + $0x30] sm:$0xff]
    %v171 = vld [vmem:[#allocation8 + $0x38] sm:$0xff]
    %v174 = vunpack.c.l.b16 %v162
    %v175 = vunpack.c.l.b16 %v163
    %v176 = vpack.c.b16 %v175, %v174
    %v185 = vunpack.c.l.b16 %v164
    %v186 = vunpack.c.h.b16 %v164
    %v187 = vunpack.c.l.b16 %v165
    %v188 = vunpack.c.h.b16 %v165
    %v189 = vunpack.c.l.b16 %v166
    %v190 = vunpack.c.h.b16 %v166
    %v191 = vunpack.c.l.b16 %v167
    %v192 = vunpack.c.h.b16 %v167
    %v193 = vunpack.c.l.b16 %v168
    %v194 = vunpack.c.h.b16 %v168
    %v195 = vunpack.c.l.b16 %v169
    %v196 = vunpack.c.h.b16 %v169
    %v197 = vunpack.c.l.b16 %v170
    %v198 = vunpack.c.h.b16 %v170
    %v199 = vunpack.c.l.b16 %v171
    %v200 = vunpack.c.h.b16 %v171
    %v201 = vpack.c.b16 %v187, %v185
    %v202 = vpack.c.b16 %v188, %v186
    %v203 = vpack.c.b16 %v191, %v189
    %v204 = vpack.c.b16 %v192, %v190
    %v205 = vpack.c.b16 %v195, %v193
    %v206 = vpack.c.b16 %v196, %v194
    %v207 = vpack.c.b16 %v199, %v197
    %v208 = vpack.c.b16 %v200, %v198
    %vm217 = vcmask 523264
    %v219 = vsel %vm217, %v176, 0
    %221 = vmatpush.bf16.msra.mxu0 0
    %222 = vmatpush.bf16.msra.mxu0 0
    %223 = vmatpush.bf16.msra.mxu0 0
    %224 = vmatpush.bf16.msra.mxu0 0
    %225 = vmatpush.bf16.msra.mxu0 %v207
    %226 = vmatpush.bf16.msra.mxu0 %v205
    %227 = vmatpush.bf16.msra.mxu0 %v203
    %228 = vmatpush.bf16.msra.mxu0 %v201
    %229 = vmatmul.bf16.gmra.mxu0 %v219
    %v230 = vpop.f32.mrf.mxu0
    %v231 = vadd.f32 0.0, %v230
    %v232 = vpop.f32.mrf.mxu0
    %v233 = vadd.f32 0.0, %v232
    %234 = vdwg.mxu0
    %235 = vmatpush.bf16.msra.mxu0 0
    %236 = vmatpush.bf16.msra.mxu0 0
    %237 = vmatpush.bf16.msra.mxu0 0
    %238 = vmatpush.bf16.msra.mxu0 0
    %239 = vmatpush.bf16.msra.mxu0 %v208
    %240 = vmatpush.bf16.msra.mxu0 %v206
    %241 = vmatpush.bf16.msra.mxu0 %v204
    %242 = vmatpush.bf16.msra.mxu0 %v202
    %243 = vmatmul.bf16.gmra.mxu0 %v219
    %v244 = vpop.f32.mrf.mxu0
    %v245 = vadd.f32 0.0, %v244
    %v246 = vpop.f32.mrf.mxu0
    %v247 = vadd.f32 0.0, %v246
    %248 = vdwg.mxu0
    %v251 = vunpack.c.l.b16 %v128
    %v252 = vunpack.c.h.b16 %v128
    %v253 = vunpack.c.l.b16 %v129
    %v254 = vunpack.c.h.b16 %v129
    %v255 = vpack.c.b16 %v253, %v251
    %v256 = vpack.c.b16 %v254, %v252
    %v291 = vunpack.c.l.b16 %v130
    %v292 = vunpack.c.h.b16 %v130
    %v293 = vunpack.c.l.b16 %v131
    %v294 = vunpack.c.h.b16 %v131
    %v295 = vunpack.c.l.b16 %v132
    %v296 = vunpack.c.h.b16 %v132
    %v297 = vunpack.c.l.b16 %v133
    %v298 = vunpack.c.h.b16 %v133
    %v299 = vunpack.c.l.b16 %v134
    %v300 = vunpack.c.h.b16 %v134
    %v301 = vunpack.c.l.b16 %v135
    %v302 = vunpack.c.h.b16 %v135
    %v303 = vunpack.c.l.b16 %v136
    %v304 = vunpack.c.h.b16 %v136
    %v305 = vunpack.c.l.b16 %v137
    %v306 = vunpack.c.h.b16 %v137
    %v307 = vunpack.c.l.b16 %v138
    %v308 = vunpack.c.h.b16 %v138
    %v309 = vunpack.c.l.b16 %v139
    %v310 = vunpack.c.h.b16 %v139
    %v311 = vunpack.c.l.b16 %v140
    %v312 = vunpack.c.h.b16 %v140
    %v313 = vunpack.c.l.b16 %v141
    %v314 = vunpack.c.h.b16 %v141
    %v315 = vunpack.c.l.b16 %v142
    %v316 = vunpack.c.h.b16 %v142
    %v317 = vunpack.c.l.b16 %v143
    %v318 = vunpack.c.h.b16 %v143
    %v319 = vunpack.c.l.b16 %v144
    %v320 = vunpack.c.h.b16 %v144
    %v321 = vunpack.c.l.b16 %v145
    %v322 = vunpack.c.h.b16 %v145
    %v323 = vunpack.c.l.b16 %v146
    %v324 = vunpack.c.h.b16 %v146
    %v325 = vunpack.c.l.b16 %v147
    %v326 = vunpack.c.h.b16 %v147
    %v327 = vunpack.c.l.b16 %v148
    %v328 = vunpack.c.h.b16 %v148
    %v329 = vunpack.c.l.b16 %v149
    %v330 = vunpack.c.h.b16 %v149
    %v331 = vunpack.c.l.b16 %v150
    %v332 = vunpack.c.h.b16 %v150
    %v333 = vunpack.c.l.b16 %v151
    %v334 = vunpack.c.h.b16 %v151
    %v335 = vunpack.c.l.b16 %v152
    %v336 = vunpack.c.h.b16 %v152
    %v337 = vunpack.c.l.b16 %v153
    %v338 = vunpack.c.h.b16 %v153
    %v339 = vunpack.c.l.b16 %v154
    %v340 = vunpack.c.h.b16 %v154
    %v341 = vunpack.c.l.b16 %v155
    %v342 = vunpack.c.h.b16 %v155
    %v343 = vunpack.c.l.b16 %v156
    %v344 = vunpack.c.h.b16 %v156
    %v345 = vunpack.c.l.b16 %v157
    %v346 = vunpack.c.h.b16 %v157
    %v347 = vunpack.c.l.b16 %v158
    %v348 = vunpack.c.h.b16 %v158
    %v349 = vunpack.c.l.b16 %v159
    %v350 = vunpack.c.h.b16 %v159
    %v351 = vunpack.c.l.b16 %v160
    %v352 = vunpack.c.h.b16 %v160
    %v353 = vunpack.c.l.b16 %v161
    %v354 = vunpack.c.h.b16 %v161
    %v355 = vpack.c.b16 %v293, %v291
    %v356 = vpack.c.b16 %v294, %v292
    %v357 = vpack.c.b16 %v297, %v295
    %v358 = vpack.c.b16 %v298, %v296
    %v359 = vpack.c.b16 %v301, %v299
    %v360 = vpack.c.b16 %v302, %v300
    %v361 = vpack.c.b16 %v305, %v303
    %v362 = vpack.c.b16 %v306, %v304
    %v363 = vpack.c.b16 %v309, %v307
    %v364 = vpack.c.b16 %v310, %v308
    %v365 = vpack.c.b16 %v313, %v311
    %v366 = vpack.c.b16 %v314, %v312
    %v367 = vpack.c.b16 %v317, %v315
    %v368 = vpack.c.b16 %v318, %v316
    %v369 = vpack.c.b16 %v321, %v319
    %v370 = vpack.c.b16 %v322, %v320
    %v371 = vpack.c.b16 %v325, %v323
    %v372 = vpack.c.b16 %v326, %v324
    %v373 = vpack.c.b16 %v329, %v327
    %v374 = vpack.c.b16 %v330, %v328
    %v375 = vpack.c.b16 %v333, %v331
    %v376 = vpack.c.b16 %v334, %v332
    %v377 = vpack.c.b16 %v337, %v335
    %v378 = vpack.c.b16 %v338, %v336
    %v379 = vpack.c.b16 %v341, %v339
    %v380 = vpack.c.b16 %v342, %v340
    %v381 = vpack.c.b16 %v345, %v343
    %v382 = vpack.c.b16 %v346, %v344
    %v383 = vpack.c.b16 %v349, %v347
    %v384 = vpack.c.b16 %v350, %v348
    %v385 = vpack.c.b16 %v353, %v351
    %v386 = vpack.c.b16 %v354, %v352
    %419 = vmatpush.bf16.msra.mxu0 %v369
    %420 = vmatpush.bf16.msra.mxu0 %v367
    %421 = vmatpush.bf16.msra.mxu0 %v365
    %422 = vmatpush.bf16.msra.mxu0 %v363
    %423 = vmatpush.bf16.msra.mxu0 %v361
    %424 = vmatpush.bf16.msra.mxu0 %v359
    %425 = vmatpush.bf16.msra.mxu0 %v357
    %426 = vmatpush.bf16.msra.mxu0 %v355
    %427 = vmatmul.bf16.gmra.mxu0 %v255
    %v428 = vpop.f32.mrf.mxu0
    %v429 = vadd.f32 %v231, %v428
    %v430 = vpop.f32.mrf.mxu0
    %v431 = vadd.f32 %v233, %v430
    %432 = vdwg.mxu0
    %433 = vmatpush.bf16.msra.mxu0 %v385
    %434 = vmatpush.bf16.msra.mxu0 %v383
    %435 = vmatpush.bf16.msra.mxu0 %v381
    %436 = vmatpush.bf16.msra.mxu0 %v379
    %437 = vmatpush.bf16.msra.mxu0 %v377
    %438 = vmatpush.bf16.msra.mxu0 %v375
    %439 = vmatpush.bf16.msra.mxu0 %v373
    %440 = vmatpush.bf16.msra.mxu0 %v371
    %441 = vmatmul.bf16.gmra.mxu0 %v256
    %v442 = vpop.f32.mrf.mxu0
    %v443 = vadd.f32 %v429, %v442
    %v444 = vpop.f32.mrf.mxu0
    %v445 = vadd.f32 %v431, %v444
    %446 = vdwg.mxu0
    %447 = vmatpush.bf16.msra.mxu0 %v370
    %448 = vmatpush.bf16.msra.mxu0 %v368
    %449 = vmatpush.bf16.msra.mxu0 %v366
    %450 = vmatpush.bf16.msra.mxu0 %v364
    %451 = vmatpush.bf16.msra.mxu0 %v362
    %452 = vmatpush.bf16.msra.mxu0 %v360
    %453 = vmatpush.bf16.msra.mxu0 %v358
    %454 = vmatpush.bf16.msra.mxu0 %v356
    %455 = vmatmul.bf16.gmra.mxu0 %v255
    %v456 = vpop.f32.mrf.mxu0
    %v457 = vadd.f32 %v245, %v456
    %v458 = vpop.f32.mrf.mxu0
    %v459 = vadd.f32 %v247, %v458
    %460 = vdwg.mxu0
    %461 = vmatpush.bf16.msra.mxu0 %v386
    %462 = vmatpush.bf16.msra.mxu0 %v384
    %463 = vmatpush.bf16.msra.mxu0 %v382
    %464 = vmatpush.bf16.msra.mxu0 %v380
    %465 = vmatpush.bf16.msra.mxu0 %v378
    %466 = vmatpush.bf16.msra.mxu0 %v376
    %467 = vmatpush.bf16.msra.mxu0 %v374
    %468 = vmatpush.bf16.msra.mxu0 %v372
    %469 = vmatmul.bf16.gmra.mxu0 %v256
    %v470 = vpop.f32.mrf.mxu0
    %v471 = vadd.f32 %v457, %v470
    %v472 = vpop.f32.mrf.mxu0
    %v473 = vadd.f32 %v459, %v472
    %474 = vdwg.mxu0
    %v475 = vld [vmem:[%s4] sm:$0x3]
    %v477 = vperm.slane %v475, 0
    %v478 = vperm.slane %v475, 1
    %v481 = vadd.f32 %v443, %v477
    %v482 = vadd.f32 %v471, %v478
    %v483 = vadd.f32 %v445, %v477
    %v484 = vadd.f32 %v473, %v478
    %v485 = vmax.f32 %v481, 0.0
    %v486 = vmax.f32 %v482, 0.0
    %v487 = vmax.f32 %v483, 0.0
    %v488 = vmax.f32 %v484, 0.0
    %v489 = vpack.c.bf16 %v487, %v485
    %v490 = vpack.c.bf16 %v488, %v486
    %v491 = vld [vmem:[#allocation10] sm:$0xf]
    %v492 = vld [vmem:[#allocation10 + $0x4] sm:$0xf]
    %v493 = vld [vmem:[#allocation10 + $0x8] sm:$0xf]
    %v494 = vld [vmem:[#allocation10 + $0xc] sm:$0xf]
    %v495 = vld [vmem:[#allocation10 + $0x10] sm:$0xf]
    %v496 = vld [vmem:[#allocation10 + $0x14] sm:$0xf]
    %v497 = vld [vmem:[#allocation10 + $0x18] sm:$0xf]
    %v498 = vld [vmem:[#allocation10 + $0x1c] sm:$0xf]
    %v499 = vld [vmem:[#allocation10 + $0x20] sm:$0xf]
    %v500 = vld [vmem:[#allocation10 + $0x24] sm:$0xf]
    %v501 = vld [vmem:[#allocation10 + $0x28] sm:$0xf]
    %v502 = vld [vmem:[#allocation10 + $0x2c] sm:$0xf]
    %v503 = vld [vmem:[#allocation10 + $0x30] sm:$0xf]
    %v504 = vld [vmem:[#allocation10 + $0x34] sm:$0xf]
    %v505 = vld [vmem:[#allocation10 + $0x38] sm:$0xf]
    %v506 = vld [vmem:[#allocation10 + $0x3c] sm:$0xf]
    %v507 = vld [vmem:[#allocation10 + $0x40] sm:$0xf]
    %v508 = vld [vmem:[#allocation10 + $0x44] sm:$0xf]
    %v509 = vld [vmem:[#allocation10 + $0x48] sm:$0xf]
    %v510 = vld [vmem:[#allocation10 + $0x4c] sm:$0xf]
    %v511 = vld [vmem:[#allocation10 + $0x50] sm:$0xf]
    %v512 = vld [vmem:[#allocation10 + $0x54] sm:$0xf]
    %v513 = vld [vmem:[#allocation10 + $0x58] sm:$0xf]
    %v514 = vld [vmem:[#allocation10 + $0x5c] sm:$0xf]
    %v515 = vld [vmem:[#allocation10 + $0x60] sm:$0xf]
    %v516 = vld [vmem:[#allocation10 + $0x64] sm:$0xf]
    %v517 = vld [vmem:[#allocation10 + $0x68] sm:$0xf]
    %v518 = vld [vmem:[#allocation10 + $0x6c] sm:$0xf]
    %v519 = vld [vmem:[#allocation10 + $0x70] sm:$0xf]
    %v520 = vld [vmem:[#allocation10 + $0x74] sm:$0xf]
    %v521 = vld [vmem:[#allocation10 + $0x78] sm:$0xf]
    %v522 = vld [vmem:[#allocation10 + $0x7c] sm:$0xf]
    %v523 = vld [vmem:[%s6] sm:$0x1]
    %v525 = vperm.slane %v523, 0
    %v559 = vunpack.c.l.b16 %v491
    %v560 = vunpack.c.l.b16 %v492
    %v561 = vunpack.c.l.b16 %v493
    %v562 = vunpack.c.l.b16 %v494
    %v563 = vunpack.c.l.b16 %v495
    %v564 = vunpack.c.l.b16 %v496
    %v565 = vunpack.c.l.b16 %v497
    %v566 = vunpack.c.l.b16 %v498
    %v567 = vunpack.c.l.b16 %v499
    %v568 = vunpack.c.l.b16 %v500
    %v569 = vunpack.c.l.b16 %v501
    %v570 = vunpack.c.l.b16 %v502
    %v571 = vunpack.c.l.b16 %v503
    %v572 = vunpack.c.l.b16 %v504
    %v573 = vunpack.c.l.b16 %v505
    %v574 = vunpack.c.l.b16 %v506
    %v575 = vunpack.c.l.b16 %v507
    %v576 = vunpack.c.l.b16 %v508
    %v577 = vunpack.c.l.b16 %v509
    %v578 = vunpack.c.l.b16 %v510
    %v579 = vunpack.c.l.b16 %v511
    %v580 = vunpack.c.l.b16 %v512
    %v581 = vunpack.c.l.b16 %v513
    %v582 = vunpack.c.l.b16 %v514
    %v583 = vunpack.c.l.b16 %v515
    %v584 = vunpack.c.l.b16 %v516
    %v585 = vunpack.c.l.b16 %v517
    %v586 = vunpack.c.l.b16 %v518
    %v587 = vunpack.c.l.b16 %v519
    %v588 = vunpack.c.l.b16 %v520
    %v589 = vunpack.c.l.b16 %v521
    %v590 = vunpack.c.l.b16 %v522
    %v591 = vpack.c.b16 %v560, %v559
    %v592 = vpack.c.b16 %v562, %v561
    %v593 = vpack.c.b16 %v564, %v563
    %v594 = vpack.c.b16 %v566, %v565
    %v595 = vpack.c.b16 %v568, %v567
    %v596 = vpack.c.b16 %v570, %v569
    %v597 = vpack.c.b16 %v572, %v571
    %v598 = vpack.c.b16 %v574, %v573
    %v599 = vpack.c.b16 %v576, %v575
    %v600 = vpack.c.b16 %v578, %v577
    %v601 = vpack.c.b16 %v580, %v579
    %v602 = vpack.c.b16 %v582, %v581
    %v603 = vpack.c.b16 %v584, %v583
    %v604 = vpack.c.b16 %v586, %v585
    %v605 = vpack.c.b16 %v588, %v587
    %v606 = vpack.c.b16 %v590, %v589
    %623 = vmatpush.bf16.msra.mxu0 %v598
    %624 = vmatpush.bf16.msra.mxu0 %v597
    %625 = vmatpush.bf16.msra.mxu0 %v596
    %626 = vmatpush.bf16.msra.mxu0 %v595
    %627 = vmatpush.bf16.msra.mxu0 %v594
    %628 = vmatpush.bf16.msra.mxu0 %v593
    %629 = vmatpush.bf16.msra.mxu0 %v592
    %630 = vmatpush.bf16.msra.mxu0 %v591
    %631 = vmatmul.bf16.gmra.mxu0 %v489
    %v632 = vpop.f32.mrf.mxu0
    %v633 = vadd.f32 %v525, %v632
    %v634 = vpop.f32.mrf.mxu0
    %v635 = vadd.f32 %v525, %v634
    %636 = vdwg.mxu0
    %637 = vmatpush.bf16.msra.mxu0 %v606
    %638 = vmatpush.bf16.msra.mxu0 %v605
    %639 = vmatpush.bf16.msra.mxu0 %v604
    %640 = vmatpush.bf16.msra.mxu0 %v603
    %641 = vmatpush.bf16.msra.mxu0 %v602
    %642 = vmatpush.bf16.msra.mxu0 %v601
    %643 = vmatpush.bf16.msra.mxu0 %v600
    %644 = vmatpush.bf16.msra.mxu0 %v599
    %645 = vmatmul.bf16.gmra.mxu0 %v490
    %v646 = vpop.f32.mrf.mxu0
    %v647 = vadd.f32 %v633, %v646
    %v648 = vpop.f32.mrf.mxu0
    %v649 = vadd.f32 %v635, %v648
    %650 = vdwg.mxu0
    %v651 = vmax.f32 %v647, 0.0
    %v652 = vmax.f32 %v649, 0.0
    %v653 = vpack.c.bf16 %v652, %v651
    %v654 = vld [vmem:[#allocation11] sm:$0xf]
    %v655 = vld [vmem:[#allocation11 + $0x4] sm:$0xf]
    %v656 = vld [vmem:[#allocation11 + $0x8] sm:$0xf]
    %v657 = vld [vmem:[#allocation11 + $0xc] sm:$0xf]
    %v658 = vld [vmem:[#allocation11 + $0x10] sm:$0xf]
    %v659 = vld [vmem:[#allocation11 + $0x14] sm:$0xf]
    %v660 = vld [vmem:[#allocation11 + $0x18] sm:$0xf]
    %v661 = vld [vmem:[#allocation11 + $0x1c] sm:$0xf]
    %v662 = vld [vmem:[#allocation11 + $0x20] sm:$0xf]
    %v663 = vld [vmem:[#allocation11 + $0x24] sm:$0xf]
    %v664 = vld [vmem:[#allocation11 + $0x28] sm:$0xf]
    %v665 = vld [vmem:[#allocation11 + $0x2c] sm:$0xf]
    %v666 = vld [vmem:[#allocation11 + $0x30] sm:$0xf]
    %v667 = vld [vmem:[#allocation11 + $0x34] sm:$0xf]
    %v668 = vld [vmem:[#allocation11 + $0x38] sm:$0xf]
    %v669 = vld [vmem:[#allocation11 + $0x3c] sm:$0xf]
    %v670 = vld [vmem:[%s8] sm:$0x1]
    %v672 = vperm.slane %v670, 0
    %v690 = vunpack.c.l.b16 %v654
    %v691 = vunpack.c.l.b16 %v655
    %v692 = vunpack.c.l.b16 %v656
    %v693 = vunpack.c.l.b16 %v657
    %v694 = vunpack.c.l.b16 %v658
    %v695 = vunpack.c.l.b16 %v659
    %v696 = vunpack.c.l.b16 %v660
    %v697 = vunpack.c.l.b16 %v661
    %v698 = vunpack.c.l.b16 %v662
    %v699 = vunpack.c.l.b16 %v663
    %v700 = vunpack.c.l.b16 %v664
    %v701 = vunpack.c.l.b16 %v665
    %v702 = vunpack.c.l.b16 %v666
    %v703 = vunpack.c.l.b16 %v667
    %v704 = vunpack.c.l.b16 %v668
    %v705 = vunpack.c.l.b16 %v669
    %v706 = vpack.c.b16 %v691, %v690
    %v707 = vpack.c.b16 %v693, %v692
    %v708 = vpack.c.b16 %v695, %v694
    %v709 = vpack.c.b16 %v697, %v696
    %v710 = vpack.c.b16 %v699, %v698
    %v711 = vpack.c.b16 %v701, %v700
    %v712 = vpack.c.b16 %v703, %v702
    %v713 = vpack.c.b16 %v705, %v704
    %722 = vmatpush.bf16.msra.mxu0 %v713
    %723 = vmatpush.bf16.msra.mxu0 %v712
    %724 = vmatpush.bf16.msra.mxu0 %v711
    %725 = vmatpush.bf16.msra.mxu0 %v710
    %726 = vmatpush.bf16.msra.mxu0 %v709
    %727 = vmatpush.bf16.msra.mxu0 %v708
    %728 = vmatpush.bf16.msra.mxu0 %v707
    %729 = vmatpush.bf16.msra.mxu0 %v706
    %730 = vmatmul.bf16.gmra.mxu0 %v653
    %v731 = vpop.f32.mrf.mxu0
    %v732 = vadd.f32 %v672, %v731
    %v733 = vpop.f32.mrf.mxu0
    %v734 = vadd.f32 %v672, %v733
    %735 = vdwg.mxu0
    %736 = vmax.xlane.f32.xlu0 %v732
    %v737 = vpop.xlane.xlu0 %736
    %738 = vmax.xlane.f32.xlu0 %v734
    %v739 = vpop.xlane.xlu0 %738
    %v740 = vsub.f32 %v732, %v737
    %v741 = vsub.f32 %v734, %v739
    %v742 = vmul.f32 %v740, 1.442695
    %v743 = vpow.pop %v742
    %v744 = vmul.f32 %v741, 1.442695
    %v745 = vpow.pop %v744
    %746 = vadd.xlane.f32.xlu0 %v743
    %v747 = vpop.xlane.xlu0 %746
    %748 = vadd.xlane.f32.xlu0 %v745
    %v749 = vpop.xlane.xlu0 %748
    %v750 = vrcp.pop %v747
    %v751 = vrcp.pop %v749
    %v752 = vmul.f32 %v743, %v750
    %v753 = vmul.f32 %v745, %v751
    %754 = vst [vmem:[#allocation13] sm:$0xff] %v752
    %755 = vst [vmem:[#allocation13 + $0x8] sm:$0xff] %v753
    // Predicated region
    $region62: #{tpu_custom_call.1} parent=1 // pred_check
      _
    $region63: #{tpu_custom_call.1} parent=1 // pred_check_branch
      %757 = sbr.rel (0) target = $region65
    $region64: #{tpu_custom_call.1} parent=1 // pred_region
      %759 = vsyncadd [#allocation4], 0
      %s760 = sshll.u32 [#allocation13], 4
      %s761 = int_to_ptr.vmem [resolvable:$true] %s760
      %s762 = sshll.u32 %s9, 4
      %s763 = int_to_ptr.hbm [resolvable:$true] %s762
      %768 = dma.vmem_to_hbm [thread:$0]  %s761, 256, %s763, [#allocation4], 128, 128, 8
    $region65: #{tpu_custom_call.1} parent=1 // pred_fallthru
      _
    // Predicated region
    $region66: #{tpu_custom_call.1} parent=1 // pred_check
      _
    $region67: #{tpu_custom_call.1} parent=1 // pred_check_branch
      %770 = sbr.rel (0) target = $region69
    $region68: #{tpu_custom_call.1} parent=1 // pred_region
      %772 = dma.done [#allocation4], 256
    $region69: #{tpu_custom_call.1} parent=1 // pred_fallthru
      _
    %773 = vsyncpa [#allocation3], 1
    %774 = vsyncpa [#allocation6], 1
    %775 = vsyncpa [#allocation9], 1
    %776 = vsyncpa [#allocation12], 1
    %777 = vsyncpa [#allocation4], 1

</llo_original>
